<compile_context>
chip_gen: v7x
topology: tpu7x:2x2x1
jax: 0.10.0
libtpu: 0.0.40
codegen_flags: <defaults>
</compile_context>

<pallas_src>
import math

import jax
import jax.numpy as jnp
import numpy as np
from jax.experimental import pallas as pl
from jax.experimental.pallas import tpu as pltpu

KS = 5        # conv kernel size
H = W = 12    # input spatial size
O1 = 8        # 12 - 5 + 1
O2 = 4        # 8 - 5 + 1  (== conv_shape1)
NCONV1 = 3 * O1 * O1      # 192
NCONV2 = O2 * O2          # 16
NX2 = 21
NFC1, NFC2, NFC3 = 48, 32, 10
OUT_PAD = 128             # lane-dense padded output width


def _round_up(x, m):
    return (x + m - 1) // m * m


# ------------------------------------------------------------------ kernel ---

def net_kernel(x1_ref, x2_ref,
               wc1_ref, bc1_ref, wc2_ref, bc2_ref,
               w1a_ref, w1b_ref, b1_ref,
               w2_ref, b2_ref, w3_ref, b3_ref,
               out_ref):
    x1 = x1_ref[...]                                   # (BT, 144)
    x2 = x2_ref[...]                                   # (BT, 21)

    # conv11 as Toeplitz matmul + ReLU -> (BT, 192)
    h = jnp.dot(x1, wc1_ref[...], preferred_element_type=jnp.float32) + bc1_ref[...]
    h = jnp.maximum(h, 0.0)

    # conv12 as Toeplitz matmul + ReLU -> (BT, 16)
    h = jnp.dot(h, wc2_ref[...], preferred_element_type=jnp.float32) + bc2_ref[...]
    h = jnp.maximum(h, 0.0)

    # fc1 fused: flatten(conv) @ W1a + x2 @ W1b + b1, ReLU -> (BT, 48)
    h = (jnp.dot(h, w1a_ref[...], preferred_element_type=jnp.float32)
         + jnp.dot(x2, w1b_ref[...], preferred_element_type=jnp.float32)
         + b1_ref[...])
    h = jnp.maximum(h, 0.0)

    # fc2 + ReLU -> (BT, 32)
    h = jnp.maximum(jnp.dot(h, w2_ref[...], preferred_element_type=jnp.float32)
                    + b2_ref[...], 0.0)

    # fc3 (padded to 128 lanes) + ReLU -> (BT, 128); padded cols stay 0
    out_ref[...] = jnp.maximum(
        jnp.dot(h, w3_ref[...], preferred_element_type=jnp.float32) + b3_ref[...], 0.0)


# ----------------------------------------------------------------- wrapper ---

def net_forward(x1, x2, kp):
    """x1: (B, 1, 12, 12) f32 NCHW, x2: (B, 21) f32 -> (B, 10) f32."""
    B = x1.shape[0]
    x1f = x1.reshape(B, H * W).astype(jnp.float32)      # row-major flatten of the image
    x2f = x2.astype(jnp.float32)

    # Batch tile: big enough to amortize the ~0.35 us/step pipeline cost, multiple of 8
    # (sublane), comfortably inside v7x's 64 MiB VMEM even double-buffered.
    BT = min(1024, _round_up(B, 8))
    Bp = _round_up(B, BT)
    if Bp != B:
        x1f = jnp.pad(x1f, ((0, Bp - B), (0, 0)))
        x2f = jnp.pad(x2f, ((0, Bp - B), (0, 0)))

    vmem = pl.BlockSpec(memory_space=pltpu.MemorySpace.VMEM)

    flops = 2 * Bp * (H * W * NCONV1 + NCONV1 * NCONV2 + NCONV2 * NFC1
                      + NX2 * NFC1 + NFC1 * NFC2 + NFC2 * OUT_PAD)
    weight_bytes = 4 * (H * W * NCONV1 + NCONV1 + NCONV1 * NCONV2 + NCONV2
                        + NCONV2 * NFC1 + NX2 * NFC1 + NFC1
                        + NFC1 * NFC2 + NFC2 + NFC2 * OUT_PAD + OUT_PAD)
    bytes_accessed = 4 * Bp * (H * W + NX2 + OUT_PAD) + weight_bytes

    out = pl.pallas_call(
        net_kernel,
        grid=(Bp // BT,),
        out_shape=jax.ShapeDtypeStruct((Bp, OUT_PAD), jnp.float32),
        in_specs=[
            pl.BlockSpec((BT, H * W), lambda b: (b, 0)),   # x1 slab
            pl.BlockSpec((BT, NX2), lambda b: (b, 0)),     # x2 slab
            vmem, vmem, vmem, vmem,                        # conv Toeplitz weights / biases
            vmem, vmem, vmem,                              # fc1 (split) + bias
            vmem, vmem, vmem, vmem,                        # fc2, fc3 (padded)
        ],
        out_specs=pl.BlockSpec((BT, OUT_PAD), lambda b: (b, 0)),
        compiler_params=pltpu.CompilerParams(dimension_semantics=("parallel",)),
        cost_estimate=pl.CostEstimate(flops=flops, transcendentals=0,
                                      bytes_accessed=bytes_accessed),
    )(x1f, x2f,
      kp["wc1"], kp["bc1"], kp["wc2"], kp["bc2"],
      kp["w1a"], kp["w1b"], kp["b1"],
      kp["w2"], kp["b2"], kp["w3"], kp["b3"])
    return out[:B, :NFC3]


# ------------------------------------------------- host-side param building ---

def _toeplitz_conv1(w, b):
    """w: (3,1,5,5), b: (3,) -> W: (144, 192), bias: (1, 192)."""
    rows, cols, src = [], [], []
    for oc in range(3):
        for oh in range(O1):
            for ow in range(O1):
                col = oc * O1 * O1 + oh * O1 + ow
                for kh in range(KS):
                    for kw in range(KS):
                        rows.append((oh + kh) * W + (ow + kw))
                        cols.append(col)
                        src.append(oc * KS * KS + kh * KS + kw)
    vals = w.reshape(3 * KS * KS)[np.asarray(src)]
    Wt = jnp.zeros((H * W, NCONV1), jnp.float32).at[np.asarray(rows), np.asarray(cols)].set(vals)
    bt = jnp.repeat(b.astype(jnp.float32), O1 * O1).reshape(1, NCONV1)
    return Wt, bt


def _toeplitz_conv2(w, b):
    """w: (1,3,5,5), b: (1,) -> W: (192, 16), bias: (1, 16)."""
    rows, cols, src = [], [], []
    for ic in range(3):
        for oh in range(O2):
            for ow in range(O2):
                col = oh * O2 + ow
                for kh in range(KS):
                    for kw in range(KS):
                        rows.append(ic * O1 * O1 + (oh + kh) * O1 + (ow + kw))
                        cols.append(col)
                        src.append(ic * KS * KS + kh * KS + kw)
    vals = w.reshape(3 * KS * KS)[np.asarray(src)]
    Wt = jnp.zeros((NCONV1, NCONV2), jnp.float32).at[np.asarray(rows), np.asarray(cols)].set(vals)
    bt = jnp.broadcast_to(b.astype(jnp.float32).reshape(1, 1), (1, NCONV2))
    return Wt, bt


def prepare_kernel_params(p):
    """PyTorch-layout params -> kernel-layout params (Toeplitz convs, W^T FCs, padded fc3)."""
    wc1, bc1 = _toeplitz_conv1(p["conv11_w"], p["conv11_b"])
    wc2, bc2 = _toeplitz_conv2(p["conv12_w"], p["conv12_b"])
    w1 = p["fc1_w"].T                                   # (37, 48)
    w3 = jnp.zeros((NFC2, OUT_PAD), jnp.float32).at[:, :NFC3].set(p["fc3_w"].T)
    b3 = jnp.zeros((1, OUT_PAD), jnp.float32).at[:, :NFC3].set(p["fc3_b"].reshape(1, NFC3))
    return {
        "wc1": wc1, "bc1": bc1, "wc2": wc2, "bc2": bc2,
        "w1a": w1[:NCONV2], "w1b": w1[NCONV2:], "b1": p["fc1_b"].reshape(1, NFC1),
        "w2": p["fc2_w"].T, "b2": p["fc2_b"].reshape(1, NFC2),
        "w3": w3, "b3": b3,
    }


def init_params(key):
    """PyTorch-default-style uniform(-1/sqrt(fan_in), 1/sqrt(fan_in)), PyTorch layout."""
    def uni(k, shape, fan_in):
        bound = 1.0 / math.sqrt(fan_in)
        return jax.random.uniform(k, shape, jnp.float32, -bound, bound)

    ks = jax.random.split(key, 10)
    return {
        "conv11_w": uni(ks[0], (3, 1, KS, KS), KS * KS),
        "conv11_b": uni(ks[1], (3,), KS * KS),
        "conv12_w": uni(ks[2], (1, 3, KS, KS), 3 * KS * KS),
        "conv12_b": uni(ks[3], (1,), 3 * KS * KS),
        "fc1_w": uni(ks[4], (NFC1, NCONV2 + NX2), NCONV2 + NX2),
        "fc1_b": uni(ks[5], (NFC1,), NCONV2 + NX2),
        "fc2_w": uni(ks[6], (NFC2, NFC1), NFC1),
        "fc2_b": uni(ks[7], (NFC2,), NFC1),
        "fc3_w": uni(ks[8], (NFC3, NFC2), NFC2),
        "fc3_b": uni(ks[9], (NFC3,), NFC2),
    }


# --------------------------------------------------------------- reference ---

def net_reference(x1, x2, p):
    """Pure-JAX reference matching the PyTorch forward semantics."""
    B = x1.shape[0]
    hi = jax.lax.Precision.HIGHEST
    dn = ("NCHW", "OIHW", "NCHW")
    y = jax.lax.conv_general_dilated(x1, p["conv11_w"], (1, 1), "VALID",
                                     dimension_numbers=dn, precision=hi)
    y = jnp.maximum(y + p["conv11_b"].reshape(1, 3, 1, 1), 0.0)
    y = jax.lax.conv_general_dilated(y, p["conv12_w"], (1, 1), "VALID",
                                     dimension_numbers=dn, precision=hi)
    y = jnp.maximum(y + p["conv12_b"].reshape(1, 1, 1, 1), 0.0)
    flat = y.reshape(B, NCONV2)
    xcat = jnp.concatenate([flat, x2], axis=1)
    h = jnp.maximum(jnp.dot(xcat, p["fc1_w"].T, precision=hi) + p["fc1_b"], 0.0)
    h = jnp.maximum(jnp.dot(h, p["fc2_w"].T, precision=hi) + p["fc2_b"], 0.0)
    h = jnp.maximum(jnp.dot(h, p["fc3_w"].T, precision=hi) + p["fc3_b"], 0.0)
    return h


if __name__ == "__main__":
    key = jax.random.PRNGKey(0)
    k1, k2, kp = jax.random.split(key, 3)
    B = 2
    x1 = jax.random.normal(k1, (B, 1, H, W), jnp.float32)
    x2 = jax.random.normal(k2, (B, NX2), jnp.float32)

    params = init_params(kp)
    kparams = prepare_kernel_params(params)

    out = jax.block_until_ready(net_forward(x1, x2, kparams))
    ref = jax.block_until_ready(net_reference(x1, x2, params))

    assert out.shape == (B, NFC3)
    # Tightened (was 2e-2): all-f32 path, small margin for MXU summation-order effects.
    np.testing.assert_allclose(np.asarray(out), np.asarray(ref), rtol=2e-3, atol=2e-3)
    print("KERNEL_OK")
</pallas_src>

<mosaic_0001>
module attributes {stable_mosaic.version = 11 : i64} {
  func.func @net_kernel(%arg0: i32, %arg1: memref<8x144xf32, #tpu.memory_space<vmem>>, %arg2: memref<8x21xf32, #tpu.memory_space<vmem>>, %arg3: memref<144x192xf32, #tpu.memory_space<vmem>>, %arg4: memref<1x192xf32, #tpu.memory_space<vmem>>, %arg5: memref<192x16xf32, #tpu.memory_space<vmem>>, %arg6: memref<1x16xf32, #tpu.memory_space<vmem>>, %arg7: memref<16x48xf32, #tpu.memory_space<vmem>>, %arg8: memref<21x48xf32, #tpu.memory_space<vmem>>, %arg9: memref<1x48xf32, #tpu.memory_space<vmem>>, %arg10: memref<48x32xf32, #tpu.memory_space<vmem>>, %arg11: memref<1x32xf32, #tpu.memory_space<vmem>>, %arg12: memref<32x128xf32, #tpu.memory_space<vmem>>, %arg13: memref<1x128xf32, #tpu.memory_space<vmem>>, %arg14: memref<8x128xf32, #tpu.memory_space<vmem>>) attributes {dimension_semantics = [#tpu.dimension_semantics<parallel>], iteration_bounds = array<i64: 1>, scalar_prefetch = 0 : i64, scratch_operands = 0 : i64, tpu.core_type = #tpu.core_type<tc>, window_params = [{transform_indices = @transform_0, window_bounds = array<i64: 8, 144>}, {transform_indices = @transform_1, window_bounds = array<i64: 8, 21>}, {pipeline_mode = #tpu.pipeline_mode<synchronous>, transform_indices = @transform_2, window_bounds = array<i64: 144, 192>}, {pipeline_mode = #tpu.pipeline_mode<synchronous>, transform_indices = @transform_3, window_bounds = array<i64: 1, 192>}, {pipeline_mode = #tpu.pipeline_mode<synchronous>, transform_indices = @transform_4, window_bounds = array<i64: 192, 16>}, {pipeline_mode = #tpu.pipeline_mode<synchronous>, transform_indices = @transform_5, window_bounds = array<i64: 1, 16>}, {pipeline_mode = #tpu.pipeline_mode<synchronous>, transform_indices = @transform_6, window_bounds = array<i64: 16, 48>}, {pipeline_mode = #tpu.pipeline_mode<synchronous>, transform_indices = @transform_7, window_bounds = array<i64: 21, 48>}, {pipeline_mode = #tpu.pipeline_mode<synchronous>, transform_indices = @transform_8, window_bounds = array<i64: 1, 48>}, {pipeline_mode = #tpu.pipeline_mode<synchronous>, transform_indices = @transform_9, window_bounds = array<i64: 48, 32>}, {pipeline_mode = #tpu.pipeline_mode<synchronous>, transform_indices = @transform_10, window_bounds = array<i64: 1, 32>}, {pipeline_mode = #tpu.pipeline_mode<synchronous>, transform_indices = @transform_11, window_bounds = array<i64: 32, 128>}, {pipeline_mode = #tpu.pipeline_mode<synchronous>, transform_indices = @transform_12, window_bounds = array<i64: 1, 128>}, {transform_indices = @transform_13, window_bounds = array<i64: 8, 128>}]} {
    %c0 = arith.constant 0 : index
    %c0_0 = arith.constant 0 : index
    %0 = vector.load %arg1[%c0, %c0_0] : memref<8x144xf32, #tpu.memory_space<vmem>>, vector<8x144xf32>
    %c0_1 = arith.constant 0 : index
    %c0_2 = arith.constant 0 : index
    %1 = vector.load %arg2[%c0_1, %c0_2] : memref<8x21xf32, #tpu.memory_space<vmem>>, vector<8x21xf32>
    %c0_3 = arith.constant 0 : index
    %c0_4 = arith.constant 0 : index
    %2 = vector.load %arg3[%c0_3, %c0_4] : memref<144x192xf32, #tpu.memory_space<vmem>>, vector<144x192xf32>
    %cst = arith.constant dense<0.000000e+00> : vector<8x192xf32>
    %3 = tpu.matmul %0, %2, %cst {dimension_numbers = #tpu.dot_dimension_numbers<[1], [0], [0], [1], [0, 0, 1, 1], [], []>} : vector<8x144xf32>, vector<144x192xf32>, vector<8x192xf32> -> vector<8x192xf32>
    %c0_5 = arith.constant 0 : index
    %c0_6 = arith.constant 0 : index
    %4 = vector.load %arg4[%c0_5, %c0_6] : memref<1x192xf32, #tpu.memory_space<vmem>>, vector<1x192xf32>
    %5 = vector.broadcast %4 : vector<1x192xf32> to vector<8x192xf32>
    %6 = arith.addf %3, %5 : vector<8x192xf32>
    %cst_7 = arith.constant 0.000000e+00 : f32
    %7 = vector.broadcast %cst_7 : f32 to vector<8x192xf32>
    %8 = arith.maximumf %6, %7 : vector<8x192xf32>
    %c0_8 = arith.constant 0 : index
    %c0_9 = arith.constant 0 : index
    %9 = vector.load %arg5[%c0_8, %c0_9] : memref<192x16xf32, #tpu.memory_space<vmem>>, vector<192x16xf32>
    %cst_10 = arith.constant dense<0.000000e+00> : vector<8x16xf32>
    %10 = tpu.matmul %8, %9, %cst_10 {dimension_numbers = #tpu.dot_dimension_numbers<[1], [0], [0], [1], [0, 0, 1, 1], [], []>} : vector<8x192xf32>, vector<192x16xf32>, vector<8x16xf32> -> vector<8x16xf32>
    %c0_11 = arith.constant 0 : index
    %c0_12 = arith.constant 0 : index
    %11 = vector.load %arg6[%c0_11, %c0_12] : memref<1x16xf32, #tpu.memory_space<vmem>>, vector<1x16xf32>
    %12 = vector.broadcast %11 : vector<1x16xf32> to vector<8x16xf32>
    %13 = arith.addf %10, %12 : vector<8x16xf32>
    %cst_13 = arith.constant 0.000000e+00 : f32
    %14 = vector.broadcast %cst_13 : f32 to vector<8x16xf32>
    %15 = arith.maximumf %13, %14 : vector<8x16xf32>
    %c0_14 = arith.constant 0 : index
    %c0_15 = arith.constant 0 : index
    %16 = vector.load %arg7[%c0_14, %c0_15] : memref<16x48xf32, #tpu.memory_space<vmem>>, vector<16x48xf32>
    %cst_16 = arith.constant dense<0.000000e+00> : vector<8x48xf32>
    %17 = tpu.matmul %15, %16, %cst_16 {dimension_numbers = #tpu.dot_dimension_numbers<[1], [0], [0], [1], [0, 0, 1, 1], [], []>} : vector<8x16xf32>, vector<16x48xf32>, vector<8x48xf32> -> vector<8x48xf32>
    %c0_17 = arith.constant 0 : index
    %c0_18 = arith.constant 0 : index
    %18 = vector.load %arg8[%c0_17, %c0_18] : memref<21x48xf32, #tpu.memory_space<vmem>>, vector<21x48xf32>
    %cst_19 = arith.constant dense<0.000000e+00> : vector<8x48xf32>
    %19 = tpu.matmul %1, %18, %cst_19 {dimension_numbers = #tpu.dot_dimension_numbers<[1], [0], [0], [1], [0, 0, 1, 1], [], []>} : vector<8x21xf32>, vector<21x48xf32>, vector<8x48xf32> -> vector<8x48xf32>
    %20 = arith.addf %17, %19 : vector<8x48xf32>
    %c0_20 = arith.constant 0 : index
    %c0_21 = arith.constant 0 : index
    %21 = vector.load %arg9[%c0_20, %c0_21] : memref<1x48xf32, #tpu.memory_space<vmem>>, vector<1x48xf32>
    %22 = vector.broadcast %21 : vector<1x48xf32> to vector<8x48xf32>
    %23 = arith.addf %20, %22 : vector<8x48xf32>
    %cst_22 = arith.constant 0.000000e+00 : f32
    %24 = vector.broadcast %cst_22 : f32 to vector<8x48xf32>
    %25 = arith.maximumf %23, %24 : vector<8x48xf32>
    %c0_23 = arith.constant 0 : index
    %c0_24 = arith.constant 0 : index
    %26 = vector.load %arg10[%c0_23, %c0_24] : memref<48x32xf32, #tpu.memory_space<vmem>>, vector<48x32xf32>
    %cst_25 = arith.constant dense<0.000000e+00> : vector<8x32xf32>
    %27 = tpu.matmul %25, %26, %cst_25 {dimension_numbers = #tpu.dot_dimension_numbers<[1], [0], [0], [1], [0, 0, 1, 1], [], []>} : vector<8x48xf32>, vector<48x32xf32>, vector<8x32xf32> -> vector<8x32xf32>
    %c0_26 = arith.constant 0 : index
    %c0_27 = arith.constant 0 : index
    %28 = vector.load %arg11[%c0_26, %c0_27] : memref<1x32xf32, #tpu.memory_space<vmem>>, vector<1x32xf32>
    %29 = vector.broadcast %28 : vector<1x32xf32> to vector<8x32xf32>
    %30 = arith.addf %27, %29 : vector<8x32xf32>
    %cst_28 = arith.constant 0.000000e+00 : f32
    %31 = vector.broadcast %cst_28 : f32 to vector<8x32xf32>
    %32 = arith.maximumf %30, %31 : vector<8x32xf32>
    %c0_29 = arith.constant 0 : index
    %c0_30 = arith.constant 0 : index
    %33 = vector.load %arg12[%c0_29, %c0_30] : memref<32x128xf32, #tpu.memory_space<vmem>>, vector<32x128xf32>
    %cst_31 = arith.constant dense<0.000000e+00> : vector<8x128xf32>
    %34 = tpu.matmul %32, %33, %cst_31 {dimension_numbers = #tpu.dot_dimension_numbers<[1], [0], [0], [1], [0, 0, 1, 1], [], []>} : vector<8x32xf32>, vector<32x128xf32>, vector<8x128xf32> -> vector<8x128xf32>
    %c0_32 = arith.constant 0 : index
    %c0_33 = arith.constant 0 : index
    %35 = vector.load %arg13[%c0_32, %c0_33] : memref<1x128xf32, #tpu.memory_space<vmem>>, vector<1x128xf32>
    %36 = vector.broadcast %35 : vector<1x128xf32> to vector<8x128xf32>
    %37 = arith.addf %34, %36 : vector<8x128xf32>
    %cst_34 = arith.constant 0.000000e+00 : f32
    %38 = vector.broadcast %cst_34 : f32 to vector<8x128xf32>
    %39 = arith.maximumf %37, %38 : vector<8x128xf32>
    %c0_35 = arith.constant 0 : index
    %c0_36 = arith.constant 0 : index
    %40 = vector.load %arg14[%c0_35, %c0_36] : memref<8x128xf32, #tpu.memory_space<vmem>>, vector<8x128xf32>
    tpu.vector_store %arg14[%c0_35, %c0_36], %39 {strides = array<i32>} : memref<8x128xf32, #tpu.memory_space<vmem>>, vector<8x128xf32>,
    return
  }
  func.func @transform_0(%arg0: i32) -> (i32, i32) {
    %c0_i32 = arith.constant 0 : i32
    %c0_i32_0 = arith.constant 0 : i32
    return %arg0, %c0_i32 : i32, i32
  }
  func.func @transform_1(%arg0: i32) -> (i32, i32) {
    %c0_i32 = arith.constant 0 : i32
    %c0_i32_0 = arith.constant 0 : i32
    return %arg0, %c0_i32 : i32, i32
  }
  func.func @transform_2(%arg0: i32) -> (i32, i32) {
    %c0_i32 = arith.constant 0 : i32
    %c0_i32_0 = arith.constant 0 : i32
    %c0_i32_1 = arith.constant 0 : i32
    return %c0_i32, %c0_i32_0 : i32, i32
  }
  func.func @transform_3(%arg0: i32) -> (i32, i32) {
    %c0_i32 = arith.constant 0 : i32
    %c0_i32_0 = arith.constant 0 : i32
    %c0_i32_1 = arith.constant 0 : i32
    return %c0_i32, %c0_i32_0 : i32, i32
  }
  func.func @transform_4(%arg0: i32) -> (i32, i32) {
    %c0_i32 = arith.constant 0 : i32
    %c0_i32_0 = arith.constant 0 : i32
    %c0_i32_1 = arith.constant 0 : i32
    return %c0_i32, %c0_i32_0 : i32, i32
  }
  func.func @transform_5(%arg0: i32) -> (i32, i32) {
    %c0_i32 = arith.constant 0 : i32
    %c0_i32_0 = arith.constant 0 : i32
    %c0_i32_1 = arith.constant 0 : i32
    return %c0_i32, %c0_i32_0 : i32, i32
  }
  func.func @transform_6(%arg0: i32) -> (i32, i32) {
    %c0_i32 = arith.constant 0 : i32
    %c0_i32_0 = arith.constant 0 : i32
    %c0_i32_1 = arith.constant 0 : i32
    return %c0_i32, %c0_i32_0 : i32, i32
  }
  func.func @transform_7(%arg0: i32) -> (i32, i32) {
    %c0_i32 = arith.constant 0 : i32
    %c0_i32_0 = arith.constant 0 : i32
    %c0_i32_1 = arith.constant 0 : i32
    return %c0_i32, %c0_i32_0 : i32, i32
  }
  func.func @transform_8(%arg0: i32) -> (i32, i32) {
    %c0_i32 = arith.constant 0 : i32
    %c0_i32_0 = arith.constant 0 : i32
    %c0_i32_1 = arith.constant 0 : i32
    return %c0_i32, %c0_i32_0 : i32, i32
  }
  func.func @transform_9(%arg0: i32) -> (i32, i32) {
    %c0_i32 = arith.constant 0 : i32
    %c0_i32_0 = arith.constant 0 : i32
    %c0_i32_1 = arith.constant 0 : i32
    return %c0_i32, %c0_i32_0 : i32, i32
  }
  func.func @transform_10(%arg0: i32) -> (i32, i32) {
    %c0_i32 = arith.constant 0 : i32
    %c0_i32_0 = arith.constant 0 : i32
    %c0_i32_1 = arith.constant 0 : i32
    return %c0_i32, %c0_i32_0 : i32, i32
  }
  func.func @transform_11(%arg0: i32) -> (i32, i32) {
    %c0_i32 = arith.constant 0 : i32
    %c0_i32_0 = arith.constant 0 : i32
    %c0_i32_1 = arith.constant 0 : i32
    return %c0_i32, %c0_i32_0 : i32, i32
  }
  func.func @transform_12(%arg0: i32) -> (i32, i32) {
    %c0_i32 = arith.constant 0 : i32
    %c0_i32_0 = arith.constant 0 : i32
    %c0_i32_1 = arith.constant 0 : i32
    return %c0_i32, %c0_i32_0 : i32, i32
  }
  func.func @transform_13(%arg0: i32) -> (i32, i32) {
    %c0_i32 = arith.constant 0 : i32
    %c0_i32_0 = arith.constant 0 : i32
    return %arg0, %c0_i32 : i32, i32
  }
}

</mosaic_0001>

<llo_original>
// kernel: tpu_custom_call.1
$region0: #{tpu_custom_call.1}
  #allocation0 [shape = 'u32[]', space=smem, size = 0x4, offset = 0x4, fixed_abs, tag = 'smem constant byte address 0x4 - core index']
  #allocation1 [shape = 'u32[144,128]{1,0:T(1,128)}', space=vmem, size = 0x12000, scoped, tag = 'internal scratch']
  %s0 = inlined_call_operand.hbm [shape: f32[8,144], index: 0, kind: input, shape index: {}]
  %s1 = inlined_call_operand.hbm [shape: f32[8,21], index: 1, kind: input, shape index: {}]
  %s2 = inlined_call_operand.vmem [shape: f32[144,192], index: 2, kind: input, shape index: {}]
  %s3 = inlined_call_operand.vmem [shape: f32[1,192], index: 3, kind: input, shape index: {}]
  %s4 = inlined_call_operand.vmem [shape: f32[192,16], index: 4, kind: input, shape index: {}]
  %s5 = inlined_call_operand.hbm [shape: f32[1,16], index: 5, kind: input, shape index: {}]
  %s6 = inlined_call_operand.hbm [shape: f32[16,48], index: 6, kind: input, shape index: {}]
  %s7 = inlined_call_operand.hbm [shape: f32[21,48], index: 7, kind: input, shape index: {}]
  %s8 = inlined_call_operand.vmem [shape: f32[1,48], index: 8, kind: input, shape index: {}]
  %s9 = inlined_call_operand.vmem [shape: f32[48,32], index: 9, kind: input, shape index: {}]
  %s10 = inlined_call_operand.vmem [shape: f32[1,32], index: 10, kind: input, shape index: {}]
  %s11 = inlined_call_operand.vmem [shape: f32[32,128], index: 11, kind: input, shape index: {}]
  %s12 = inlined_call_operand.vmem [shape: f32[1,128], index: 12, kind: input, shape index: {}]
  %s13 = inlined_call_operand.hbm [shape: f32[8,128], index: 13, kind: output, shape index: {}]
  %s14 = sld [smem:[#allocation0]]
  $region82: #{tpu_custom_call.1} parent=0
    _
  %s16 = ssub.s32 1, %s14
  %s17 = scalar_select 0, %s16, %s14
  $region1: #{tpu_custom_call.1} parent=0
    #allocation2 [shape = 'u8[8192]{0}', space=vmem, size = 0x2000, scoped, tag = 'input window, operand 0, single buffered']
    #allocation3 [shape = 's32[1]{0}', space=sflag, size = 0x4, scoped, tag = 'scoped memory for tpu_custom_call.1']
    #allocation4 [shape = 's32[1]{0}', space=sflag, size = 0x4, scoped, tag = 'scoped memory for tpu_custom_call.1']
    #allocation5 [shape = 'u8[4096]{0}', space=vmem, size = 0x1000, scoped, tag = 'input window, operand 1, single buffered']
    #allocation6 [shape = 's32[1]{0}', space=sflag, size = 0x4, scoped, tag = 'scoped memory for tpu_custom_call.1']
    #allocation7 [shape = 'u8[512]{0}', space=vmem, size = 0x400, scoped, tag = 'input window, operand 5, single buffered']
    #allocation8 [shape = 'u8[8192]{0}', space=vmem, size = 0x2000, scoped, tag = 'input window, operand 6, single buffered']
    #allocation9 [shape = 's32[1]{0}', space=sflag, size = 0x4, scoped, tag = 'scoped memory for tpu_custom_call.1']
    #allocation10 [shape = 'u8[12288]{0}', space=vmem, size = 0x3000, scoped, tag = 'input window, operand 7, single buffered']
    #allocation11 [shape = 'u8[4096]{0}', space=vmem, size = 0x1000, scoped, tag = 'output window, operand 0, single buffered']
    %18 = vsyncpa [#allocation3], 0
    %19 = vsyncpa [#allocation6], 0
    %20 = vsyncpa [#allocation9], 0
    %21 = vsyncpa [#allocation4], 0
    // Predicated region
    $region2: #{tpu_custom_call.1} parent=1 // pred_check
      _
    $region3: #{tpu_custom_call.1} parent=1 // pred_check_branch
      %23 = sbr.rel (0) target = $region5
    $region4: #{tpu_custom_call.1} parent=1 // pred_region
      %s25 = ssub.s32 256, 256
      %26 = vsyncadd [#allocation3], %s25
      %s28 = sshll.u32 [#allocation2], 4
      %s29 = int_to_ptr.vmem [resolvable:$true] %s28
      %31 = dma.hbm_to_vmem [thread:$0]  %s0, 256, %s29, [#allocation3]
    $region5: #{tpu_custom_call.1} parent=1 // pred_fallthru
      _
    // Predicated region
    $region6: #{tpu_custom_call.1} parent=1 // pred_check
      _
    $region7: #{tpu_custom_call.1} parent=1 // pred_check_branch
      %33 = sbr.rel (0) target = $region9
    $region8: #{tpu_custom_call.1} parent=1 // pred_region
      %s35 = ssub.s32 128, 128
      %36 = vsyncadd [#allocation6], %s35
      %s38 = sshll.u32 [#allocation5], 4
      %s39 = int_to_ptr.vmem [resolvable:$true] %s38
      %41 = dma.hbm_to_vmem [thread:$0]  %s1, 128, %s39, [#allocation6]
    $region9: #{tpu_custom_call.1} parent=1 // pred_fallthru
      _
    // Predicated region
    $region10: #{tpu_custom_call.1} parent=1 // pred_check
      _
    $region11: #{tpu_custom_call.1} parent=1 // pred_check_branch
      %43 = sbr.rel (0) target = $region13
    $region12: #{tpu_custom_call.1} parent=1 // pred_region
      _
    $region13: #{tpu_custom_call.1} parent=1 // pred_fallthru
      _
    // Predicated region
    $region14: #{tpu_custom_call.1} parent=1 // pred_check
      _
    $region15: #{tpu_custom_call.1} parent=1 // pred_check_branch
      %45 = sbr.rel (0) target = $region17
    $region16: #{tpu_custom_call.1} parent=1 // pred_region
      _
    $region17: #{tpu_custom_call.1} parent=1 // pred_fallthru
      _
    // Predicated region
    $region18: #{tpu_custom_call.1} parent=1 // pred_check
      _
    $region19: #{tpu_custom_call.1} parent=1 // pred_check_branch
      %47 = sbr.rel (0) target = $region21
    $region20: #{tpu_custom_call.1} parent=1 // pred_region
      _
    $region21: #{tpu_custom_call.1} parent=1 // pred_fallthru
      _
    // Predicated region
    $region22: #{tpu_custom_call.1} parent=1 // pred_check
      _
    $region23: #{tpu_custom_call.1} parent=1 // pred_check_branch
      %49 = sbr.rel (0) target = $region25
    $region24: #{tpu_custom_call.1} parent=1 // pred_region
      %s51 = ssub.s32 16, 16
      %52 = vsyncadd [#allocation6], %s51
      %s54 = sshll.u32 [#allocation7], 4
      %s55 = int_to_ptr.vmem [resolvable:$true] %s54
      %57 = dma.hbm_to_vmem [thread:$0]  %s5, 16, %s55, [#allocation6]
    $region25: #{tpu_custom_call.1} parent=1 // pred_fallthru
      _
    // Predicated region
    $region26: #{tpu_custom_call.1} parent=1 // pred_check
      _
    $region27: #{tpu_custom_call.1} parent=1 // pred_check_branch
      %59 = sbr.rel (0) target = $region29
    $region28: #{tpu_custom_call.1} parent=1 // pred_region
      %s61 = ssub.s32 256, 256
      %62 = vsyncadd [#allocation9], %s61
      %s63 = sshll.u32 [#allocation8], 4
      %s64 = int_to_ptr.vmem [resolvable:$true] %s63
      %69 = dma.hbm_to_vmem [thread:$0]  %s6, 256, %s64, [#allocation9], 128, 128, 8
    $region29: #{tpu_custom_call.1} parent=1 // pred_fallthru
      _
    // Predicated region
    $region30: #{tpu_custom_call.1} parent=1 // pred_check
      _
    $region31: #{tpu_custom_call.1} parent=1 // pred_check_branch
      %71 = sbr.rel (0) target = $region33
    $region32: #{tpu_custom_call.1} parent=1 // pred_region
      %s73 = ssub.s32 384, 384
      %74 = vsyncadd [#allocation9], %s73
      %s75 = sshll.u32 [#allocation10], 4
      %s76 = int_to_ptr.vmem [resolvable:$true] %s75
      %81 = dma.hbm_to_vmem [thread:$0]  %s7, 384, %s76, [#allocation9], 128, 128, 8
    $region33: #{tpu_custom_call.1} parent=1 // pred_fallthru
      _
    // Predicated region
    $region34: #{tpu_custom_call.1} parent=1 // pred_check
      _
    $region35: #{tpu_custom_call.1} parent=1 // pred_check_branch
      %83 = sbr.rel (0) target = $region37
    $region36: #{tpu_custom_call.1} parent=1 // pred_region
      _
    $region37: #{tpu_custom_call.1} parent=1 // pred_fallthru
      _
    // Predicated region
    $region38: #{tpu_custom_call.1} parent=1 // pred_check
      _
    $region39: #{tpu_custom_call.1} parent=1 // pred_check_branch
      %85 = sbr.rel (0) target = $region41
    $region40: #{tpu_custom_call.1} parent=1 // pred_region
      _
    $region41: #{tpu_custom_call.1} parent=1 // pred_fallthru
      _
    // Predicated region
    $region42: #{tpu_custom_call.1} parent=1 // pred_check
      _
    $region43: #{tpu_custom_call.1} parent=1 // pred_check_branch
      %87 = sbr.rel (0) target = $region45
    $region44: #{tpu_custom_call.1} parent=1 // pred_region
      _
    $region45: #{tpu_custom_call.1} parent=1 // pred_fallthru
      _
    // Predicated region
    $region46: #{tpu_custom_call.1} parent=1 // pred_check
      _
    $region47: #{tpu_custom_call.1} parent=1 // pred_check_branch
      %89 = sbr.rel (0) target = $region49
    $region48: #{tpu_custom_call.1} parent=1 // pred_region
      _
    $region49: #{tpu_custom_call.1} parent=1 // pred_fallthru
      _
    // Predicated region
    $region50: #{tpu_custom_call.1} parent=1 // pred_check
      _
    $region51: #{tpu_custom_call.1} parent=1 // pred_check_branch
      %91 = sbr.rel (0) target = $region53
    $region52: #{tpu_custom_call.1} parent=1 // pred_region
      _
    $region53: #{tpu_custom_call.1} parent=1 // pred_fallthru
      _
    // Predicated region
    $region54: #{tpu_custom_call.1} parent=1 // pred_check
      _
    $region55: #{tpu_custom_call.1} parent=1 // pred_check_branch
      %93 = sbr.rel (0) target = $region57
    $region56: #{tpu_custom_call.1} parent=1 // pred_region
      %94 = dma.done [#allocation3], 256
    $region57: #{tpu_custom_call.1} parent=1 // pred_fallthru
      _
    // Predicated region
    $region58: #{tpu_custom_call.1} parent=1 // pred_check
      _
    $region59: #{tpu_custom_call.1} parent=1 // pred_check_branch
      %96 = sbr.rel (0) target = $region61
    $region60: #{tpu_custom_call.1} parent=1 // pred_region
      %97 = dma.done [#allocation6], 128
    $region61: #{tpu_custom_call.1} parent=1 // pred_fallthru
      _
    // Predicated region
    $region62: #{tpu_custom_call.1} parent=1 // pred_check
      _
    $region63: #{tpu_custom_call.1} parent=1 // pred_check_branch
      %99 = sbr.rel (0) target = $region65
    $region64: #{tpu_custom_call.1} parent=1 // pred_region
      %100 = dma.done [#allocation6], 16
    $region65: #{tpu_custom_call.1} parent=1 // pred_fallthru
      _
    // Predicated region
    $region66: #{tpu_custom_call.1} parent=1 // pred_check
      _
    $region67: #{tpu_custom_call.1} parent=1 // pred_check_branch
      %102 = sbr.rel (0) target = $region69
    $region68: #{tpu_custom_call.1} parent=1 // pred_region
      %103 = dma.done [#allocation9], 256
    $region69: #{tpu_custom_call.1} parent=1 // pred_fallthru
      _
    // Predicated region
    $region70: #{tpu_custom_call.1} parent=1 // pred_check
      _
    $region71: #{tpu_custom_call.1} parent=1 // pred_check_branch
      %105 = sbr.rel (0) target = $region73
    $region72: #{tpu_custom_call.1} parent=1 // pred_region
      %106 = dma.done [#allocation9], 384
    $region73: #{tpu_custom_call.1} parent=1 // pred_fallthru
      _
    %v107 = vld [vmem:[#allocation2] sm:$0xff]
    %v108 = vld [vmem:[#allocation2 + $0x8] sm:$0xff]
    %v109 = vld [vmem:[#allocation5] sm:$0xff]
    %v110 = vld [vmem:[%s2] sm:$0xff]
    %v111 = vld [vmem:[%s2 + $0x8] sm:$0xff]
    %v112 = vld [vmem:[%s2 + $0x10] sm:$0xff]
    %v113 = vld [vmem:[%s2 + $0x18] sm:$0xff]
    %v114 = vld [vmem:[%s2 + $0x20] sm:$0xff]
    %v115 = vld [vmem:[%s2 + $0x28] sm:$0xff]
    %v116 = vld [vmem:[%s2 + $0x30] sm:$0xff]
    %v117 = vld [vmem:[%s2 + $0x38] sm:$0xff]
    %v118 = vld [vmem:[%s2 + $0x40] sm:$0xff]
    %v119 = vld [vmem:[%s2 + $0x48] sm:$0xff]
    %v120 = vld [vmem:[%s2 + $0x50] sm:$0xff]
    %v121 = vld [vmem:[%s2 + $0x58] sm:$0xff]
    %v122 = vld [vmem:[%s2 + $0x60] sm:$0xff]
    %v123 = vld [vmem:[%s2 + $0x68] sm:$0xff]
    %v124 = vld [vmem:[%s2 + $0x70] sm:$0xff]
    %v125 = vld [vmem:[%s2 + $0x78] sm:$0xff]
    %v126 = vld [vmem:[%s2 + $0x80] sm:$0xff]
    %v127 = vld [vmem:[%s2 + $0x88] sm:$0xff]
    %v128 = vld [vmem:[%s2 + $0x90] sm:$0xff]
    %v129 = vld [vmem:[%s2 + $0x98] sm:$0xff]
    %v130 = vld [vmem:[%s2 + $0xa0] sm:$0xff]
    %v131 = vld [vmem:[%s2 + $0xa8] sm:$0xff]
    %v132 = vld [vmem:[%s2 + $0xb0] sm:$0xff]
    %v133 = vld [vmem:[%s2 + $0xb8] sm:$0xff]
    %v134 = vld [vmem:[%s2 + $0xc0] sm:$0xff]
    %v135 = vld [vmem:[%s2 + $0xc8] sm:$0xff]
    %v136 = vld [vmem:[%s2 + $0xd0] sm:$0xff]
    %v137 = vld [vmem:[%s2 + $0xd8] sm:$0xff]
    %v138 = vld [vmem:[%s2 + $0xe0] sm:$0xff]
    %v139 = vld [vmem:[%s2 + $0xe8] sm:$0xff]
    %v140 = vld [vmem:[%s2 + $0xf0] sm:$0xff]
    %v141 = vld [vmem:[%s2 + $0xf8] sm:$0xff]
    %v142 = vld [vmem:[%s2 + $0x100] sm:$0xff]
    %v143 = vld [vmem:[%s2 + $0x108] sm:$0xff]
    %v144 = vld [vmem:[%s2 + $0x110] sm:$0xff]
    %v145 = vld [vmem:[%s2 + $0x118] sm:$0xff]
    %v146 = vld [vmem:[%s3] sm:$0x3]
    %v148 = vlaneseq
    %v149 = vshrl.u32 %v148, 7
    %v150 = vsub.s32 0, %v149
    %v151 = vrot.slane %v146, %v150
    %v152 = vlaneseq
    %v153 = vshrl.u32 %v152, 7
    %v154 = vsub.s32 1, %v153
    %v155 = vrot.slane %v146, %v154
    %vm158 = vcmask 130048
    %v160 = vsel %vm158, %v108, 0
    %162 = vmatprep.subr.mxu0 %v111
    %163 = vmatpush1.msra.mxu0 %v110
    %164 = vmatprep.subr.mxu0 %v113
    %165 = vmatpush1.msra.mxu0 %v112
    %166 = vmatprep.subr.mxu0 %v115
    %167 = vmatpush1.msra.mxu0 %v114
    %168 = vmatprep.subr.mxu0 %v117
    %169 = vmatpush1.msra.mxu0 %v116
    %170 = vmatprep.subr.mxu0 %v119
    %171 = vmatpush1.msra.mxu0 %v118
    %172 = vmatprep.subr.mxu0 %v121
    %173 = vmatpush1.msra.mxu0 %v120
    %174 = vmatprep.subr.mxu0 %v123
    %175 = vmatpush1.msra.mxu0 %v122
    %176 = vmatprep.subr.mxu0 %v125
    %177 = vmatpush1.msra.mxu0 %v124
    %178 = vmatprep.subr.mxu0 %v127
    %179 = vmatpush1.msra.mxu0 %v126
    %180 = vmatprep.subr.mxu0 %v129
    %181 = vmatpush1.msra.mxu0 %v128
    %182 = vmatprep.subr.mxu0 %v131
    %183 = vmatpush1.msra.mxu0 %v130
    %184 = vmatprep.subr.mxu0 %v133
    %185 = vmatpush1.msra.mxu0 %v132
    %186 = vmatprep.subr.mxu0 %v135
    %187 = vmatpush1.msra.mxu0 %v134
    %188 = vmatprep.subr.mxu0 %v137
    %189 = vmatpush1.msra.mxu0 %v136
    %190 = vmatprep.subr.mxu0 %v139
    %191 = vmatpush1.msra.mxu0 %v138
    %192 = vmatprep.subr.mxu0 %v141
    %193 = vmatpush1.msra.mxu0 %v140
    %194 = vmatprep.subr.mxu0 %v143
    %195 = vmatpush1.msra.mxu0 %v142
    %196 = vmatprep.subr.mxu0 %v145
    %197 = vmatpush1.msra.mxu0 %v144
    %198 = vmatprep.subr.mxu0 0.0
    %199 = vmatpush1.msra.mxu0 0.0
    %200 = vmatprep.subr.mxu0 0.0
    %201 = vmatpush1.msra.mxu0 0.0
    %202 = vmatprep.subr.mxu0 0.0
    %203 = vmatpush1.msra.mxu0 0.0
    %204 = vmatprep.subr.mxu0 0.0
    %205 = vmatpush1.msra.mxu0 0.0
    %206 = vmatprep.subr.mxu0 0.0
    %207 = vmatpush1.msra.mxu0 0.0
    %208 = vmatprep.subr.mxu0 0.0
    %209 = vmatpush1.msra.mxu0 0.0
    %210 = vmatprep.subr.mxu0 0.0
    %211 = vmatpush1.msra.mxu0 0.0
    %212 = vmatprep.subr.mxu0 0.0
    %213 = vmatpush1.msra.mxu0 0.0
    %214 = vmatprep.subr.mxu0 0.0
    %215 = vmatpush1.msra.mxu0 0.0
    %216 = vmatprep.subr.mxu0 0.0
    %217 = vmatpush1.msra.mxu0 0.0
    %218 = vmatprep.subr.mxu0 0.0
    %219 = vmatpush1.msra.mxu0 0.0
    %220 = vmatprep.subr.mxu0 0.0
    %221 = vmatpush1.msra.mxu0 0.0
    %222 = vmatprep.subr.mxu0 0.0
    %223 = vmatpush1.msra.mxu0 0.0
    %224 = vmatprep.subr.mxu0 0.0
    %225 = vmatpush1.msra.mxu0 0.0
    %226 = vmatprep.mubr.f32.mxu0 %v160
    %227 = vmatmul.mubr.f32.gmra.mrb[0].mxu0 %v107
    %v228 = vpop.f32.mrb[0].mxu0
    %v229 = vadd.f32 %v151, %v228
    %v230 = vpop.f32.mrb[0].mxu0
    %v231 = vadd.f32 %v155, %v230
    %232 = vdwg.mxu0
    %v233 = vmax.f32 %v229, 0.0
    %v234 = vmax.f32 %v231, 0.0
    %v235 = vld [vmem:[%s4] sm:$0xff]
    %v236 = vld [vmem:[%s4 + $0x8] sm:$0xff]
    %v237 = vld [vmem:[%s4 + $0x10] sm:$0xff]
    %v238 = vld [vmem:[%s4 + $0x18] sm:$0xff]
    %v239 = vld [vmem:[%s4 + $0x20] sm:$0xff]
    %v240 = vld [vmem:[%s4 + $0x28] sm:$0xff]
    %v241 = vld [vmem:[%s4 + $0x30] sm:$0xff]
    %v242 = vld [vmem:[%s4 + $0x38] sm:$0xff]
    %v243 = vld [vmem:[%s4 + $0x40] sm:$0xff]
    %v244 = vld [vmem:[%s4 + $0x48] sm:$0xff]
    %v245 = vld [vmem:[%s4 + $0x50] sm:$0xff]
    %v246 = vld [vmem:[%s4 + $0x58] sm:$0xff]
    %v247 = vld [vmem:[%s4 + $0x60] sm:$0xff]
    %v248 = vld [vmem:[%s4 + $0x68] sm:$0xff]
    %v249 = vld [vmem:[%s4 + $0x70] sm:$0xff]
    %v250 = vld [vmem:[%s4 + $0x78] sm:$0xff]
    %v251 = vld [vmem:[%s4 + $0x80] sm:$0xff]
    %v252 = vld [vmem:[%s4 + $0x88] sm:$0xff]
    %v253 = vld [vmem:[%s4 + $0x90] sm:$0xff]
    %v254 = vld [vmem:[%s4 + $0x98] sm:$0xff]
    %v255 = vld [vmem:[%s4 + $0xa0] sm:$0xff]
    %v256 = vld [vmem:[%s4 + $0xa8] sm:$0xff]
    %v257 = vld [vmem:[%s4 + $0xb0] sm:$0xff]
    %v258 = vld [vmem:[%s4 + $0xb8] sm:$0xff]
    %v259 = vld [vmem:[#allocation7] sm:$0x1]
    %v261 = vlaneseq
    %v262 = vshrl.u32 %v261, 7
    %v263 = vsub.s32 0, %v262
    %v264 = vrot.slane %v259, %v263
    %vm266 = vcmask 523264
    %v268 = vsel %vm266, %v234, 0
    %270 = vmatprep.subr.mxu0 0.0
    %271 = vmatpush1.msra.mxu0 %v235
    %272 = vmatprep.subr.mxu0 0.0
    %273 = vmatpush1.msra.mxu0 %v236
    %274 = vmatprep.subr.mxu0 0.0
    %275 = vmatpush1.msra.mxu0 %v237
    %276 = vmatprep.subr.mxu0 0.0
    %277 = vmatpush1.msra.mxu0 %v238
    %278 = vmatprep.subr.mxu0 0.0
    %279 = vmatpush1.msra.mxu0 %v239
    %280 = vmatprep.subr.mxu0 0.0
    %281 = vmatpush1.msra.mxu0 %v240
    %282 = vmatprep.subr.mxu0 0.0
    %283 = vmatpush1.msra.mxu0 %v241
    %284 = vmatprep.subr.mxu0 0.0
    %285 = vmatpush1.msra.mxu0 %v242
    %286 = vmatprep.subr.mxu0 0.0
    %287 = vmatpush1.msra.mxu0 %v243
    %288 = vmatprep.subr.mxu0 0.0
    %289 = vmatpush1.msra.mxu0 %v244
    %290 = vmatprep.subr.mxu0 0.0
    %291 = vmatpush1.msra.mxu0 %v245
    %292 = vmatprep.subr.mxu0 0.0
    %293 = vmatpush1.msra.mxu0 %v246
    %294 = vmatprep.subr.mxu0 0.0
    %295 = vmatpush1.msra.mxu0 %v247
    %296 = vmatprep.subr.mxu0 0.0
    %297 = vmatpush1.msra.mxu0 %v248
    %298 = vmatprep.subr.mxu0 0.0
    %299 = vmatpush1.msra.mxu0 %v249
    %300 = vmatprep.subr.mxu0 0.0
    %301 = vmatpush1.msra.mxu0 %v250
    %302 = vmatprep.subr.mxu0 0.0
    %303 = vmatpush1.msra.mxu0 %v251
    %304 = vmatprep.subr.mxu0 0.0
    %305 = vmatpush1.msra.mxu0 %v252
    %306 = vmatprep.subr.mxu0 0.0
    %307 = vmatpush1.msra.mxu0 %v253
    %308 = vmatprep.subr.mxu0 0.0
    %309 = vmatpush1.msra.mxu0 %v254
    %310 = vmatprep.subr.mxu0 0.0
    %311 = vmatpush1.msra.mxu0 %v255
    %312 = vmatprep.subr.mxu0 0.0
    %313 = vmatpush1.msra.mxu0 %v256
    %314 = vmatprep.subr.mxu0 0.0
    %315 = vmatpush1.msra.mxu0 %v257
    %316 = vmatprep.subr.mxu0 0.0
    %317 = vmatpush1.msra.mxu0 %v258
    %318 = vmatprep.subr.mxu0 0.0
    %319 = vmatpush1.msra.mxu0 0.0
    %320 = vmatprep.subr.mxu0 0.0
    %321 = vmatpush1.msra.mxu0 0.0
    %322 = vmatprep.subr.mxu0 0.0
    %323 = vmatpush1.msra.mxu0 0.0
    %324 = vmatprep.subr.mxu0 0.0
    %325 = vmatpush1.msra.mxu0 0.0
    %326 = vmatprep.subr.mxu0 0.0
    %327 = vmatpush1.msra.mxu0 0.0
    %328 = vmatprep.subr.mxu0 0.0
    %329 = vmatpush1.msra.mxu0 0.0
    %330 = vmatprep.subr.mxu0 0.0
    %331 = vmatpush1.msra.mxu0 0.0
    %332 = vmatprep.subr.mxu0 0.0
    %333 = vmatpush1.msra.mxu0 0.0
    %334 = vmatprep.mubr.f32.mxu0 %v268
    %335 = vmatmul.mubr.f32.gmra.mrb[0].mxu0 %v233
    %v336 = vpop.f32.mrb[0].mxu0
    %v337 = vadd.f32 %v264, %v336
    %v338 = vpop.f32.mrb[0].mxu0
    %339 = vdwg.mxu0
    %v340 = vmax.f32 %v337, 0.0
    %v341 = vld [vmem:[#allocation8] sm:$0xff]
    %v342 = vld [vmem:[#allocation8 + $0x8] sm:$0xff]
    %v343 = vld [vmem:[#allocation10] sm:$0xff]
    %v344 = vld [vmem:[#allocation10 + $0x8] sm:$0xff]
    %v345 = vld [vmem:[#allocation10 + $0x10] sm:$0x1f]
    %vm346 = vcmask 171008
    %v348 = vsel %vm346, %v109, 0
    %vm350 = vcmask 1044480
    %v352 = vsel %vm350, %v345, 0
    %354 = vmatprep.subr.mxu0 0.0
    %355 = vmatpush1.msra.mxu0 %v343
    %356 = vmatprep.subr.mxu0 0.0
    %357 = vmatpush1.msra.mxu0 %v344
    %358 = vmatprep.subr.mxu0 0.0
    %359 = vmatpush1.msra.mxu0 %v352
    %360 = vmatprep.subr.mxu0 0.0
    %361 = vmatpush1.msra.mxu0 0.0
    %362 = vmatprep.subr.mxu0 0.0
    %363 = vmatpush1.msra.mxu0 0.0
    %364 = vmatprep.subr.mxu0 0.0
    %365 = vmatpush1.msra.mxu0 0.0
    %366 = vmatprep.subr.mxu0 0.0
    %367 = vmatpush1.msra.mxu0 0.0
    %368 = vmatprep.subr.mxu0 0.0
    %369 = vmatpush1.msra.mxu0 0.0
    %370 = vmatprep.subr.mxu0 0.0
    %371 = vmatpush1.msra.mxu0 0.0
    %372 = vmatprep.subr.mxu0 0.0
    %373 = vmatpush1.msra.mxu0 0.0
    %374 = vmatprep.subr.mxu0 0.0
    %375 = vmatpush1.msra.mxu0 0.0
    %376 = vmatprep.subr.mxu0 0.0
    %377 = vmatpush1.msra.mxu0 0.0
    %378 = vmatprep.subr.mxu0 0.0
    %379 = vmatpush1.msra.mxu0 0.0
    %380 = vmatprep.subr.mxu0 0.0
    %381 = vmatpush1.msra.mxu0 0.0
    %382 = vmatprep.subr.mxu0 0.0
    %383 = vmatpush1.msra.mxu0 0.0
    %384 = vmatprep.subr.mxu0 0.0
    %385 = vmatpush1.msra.mxu0 0.0
    %386 = vmatprep.subr.mxu0 0.0
    %387 = vmatpush1.msra.mxu0 0.0
    %388 = vmatprep.subr.mxu0 0.0
    %389 = vmatpush1.msra.mxu0 0.0
    %390 = vmatprep.subr.mxu0 0.0
    %391 = vmatpush1.msra.mxu0 0.0
    %392 = vmatprep.subr.mxu0 0.0
    %393 = vmatpush1.msra.mxu0 0.0
    %394 = vmatprep.subr.mxu0 0.0
    %395 = vmatpush1.msra.mxu0 0.0
    %396 = vmatprep.subr.mxu0 0.0
    %397 = vmatpush1.msra.mxu0 0.0
    %398 = vmatprep.subr.mxu0 0.0
    %399 = vmatpush1.msra.mxu0 0.0
    %400 = vmatprep.subr.mxu0 0.0
    %401 = vmatpush1.msra.mxu0 0.0
    %402 = vmatprep.subr.mxu0 0.0
    %403 = vmatpush1.msra.mxu0 0.0
    %404 = vmatprep.subr.mxu0 0.0
    %405 = vmatpush1.msra.mxu0 0.0
    %406 = vmatprep.subr.mxu0 0.0
    %407 = vmatpush1.msra.mxu0 0.0
    %408 = vmatprep.subr.mxu0 0.0
    %409 = vmatpush1.msra.mxu0 0.0
    %410 = vmatprep.subr.mxu0 0.0
    %411 = vmatpush1.msra.mxu0 0.0
    %412 = vmatprep.subr.mxu0 0.0
    %413 = vmatpush1.msra.mxu0 0.0
    %414 = vmatprep.subr.mxu0 0.0
    %415 = vmatpush1.msra.mxu0 0.0
    %416 = vmatprep.subr.mxu0 0.0
    %417 = vmatpush1.msra.mxu0 0.0
    %418 = vmatprep.mubr.f32.mxu0 0.0
    %419 = vmatmul.mubr.f32.gmra.mrb[0].mxu0 %v348
    %v420 = vpop.f32.mrb[0].mxu0
    %v421 = vadd.f32 0.0, %v420
    %v422 = vpop.f32.mrb[0].mxu0
    %423 = vdwg.mxu0
    %v425 = vsel %vm158, %v340, 0
    %427 = vmatprep.subr.mxu0 0.0
    %428 = vmatpush1.msra.mxu0 %v341
    %429 = vmatprep.subr.mxu0 0.0
    %430 = vmatpush1.msra.mxu0 %v342
    %431 = vmatprep.subr.mxu0 0.0
    %432 = vmatpush1.msra.mxu0 0.0
    %433 = vmatprep.subr.mxu0 0.0
    %434 = vmatpush1.msra.mxu0 0.0
    %435 = vmatprep.subr.mxu0 0.0
    %436 = vmatpush1.msra.mxu0 0.0
    %437 = vmatprep.subr.mxu0 0.0
    %438 = vmatpush1.msra.mxu0 0.0
    %439 = vmatprep.subr.mxu0 0.0
    %440 = vmatpush1.msra.mxu0 0.0
    %441 = vmatprep.subr.mxu0 0.0
    %442 = vmatpush1.msra.mxu0 0.0
    %443 = vmatprep.subr.mxu0 0.0
    %444 = vmatpush1.msra.mxu0 0.0
    %445 = vmatprep.subr.mxu0 0.0
    %446 = vmatpush1.msra.mxu0 0.0
    %447 = vmatprep.subr.mxu0 0.0
    %448 = vmatpush1.msra.mxu0 0.0
    %449 = vmatprep.subr.mxu0 0.0
    %450 = vmatpush1.msra.mxu0 0.0
    %451 = vmatprep.subr.mxu0 0.0
    %452 = vmatpush1.msra.mxu0 0.0
    %453 = vmatprep.subr.mxu0 0.0
    %454 = vmatpush1.msra.mxu0 0.0
    %455 = vmatprep.subr.mxu0 0.0
    %456 = vmatpush1.msra.mxu0 0.0
    %457 = vmatprep.subr.mxu0 0.0
    %458 = vmatpush1.msra.mxu0 0.0
    %459 = vmatprep.subr.mxu0 0.0
    %460 = vmatpush1.msra.mxu0 0.0
    %461 = vmatprep.subr.mxu0 0.0
    %462 = vmatpush1.msra.mxu0 0.0
    %463 = vmatprep.subr.mxu0 0.0
    %464 = vmatpush1.msra.mxu0 0.0
    %465 = vmatprep.subr.mxu0 0.0
    %466 = vmatpush1.msra.mxu0 0.0
    %467 = vmatprep.subr.mxu0 0.0
    %468 = vmatpush1.msra.mxu0 0.0
    %469 = vmatprep.subr.mxu0 0.0
    %470 = vmatpush1.msra.mxu0 0.0
    %471 = vmatprep.subr.mxu0 0.0
    %472 = vmatpush1.msra.mxu0 0.0
    %473 = vmatprep.subr.mxu0 0.0
    %474 = vmatpush1.msra.mxu0 0.0
    %475 = vmatprep.subr.mxu0 0.0
    %476 = vmatpush1.msra.mxu0 0.0
    %477 = vmatprep.subr.mxu0 0.0
    %478 = vmatpush1.msra.mxu0 0.0
    %479 = vmatprep.subr.mxu0 0.0
    %480 = vmatpush1.msra.mxu0 0.0
    %481 = vmatprep.subr.mxu0 0.0
    %482 = vmatpush1.msra.mxu0 0.0
    %483 = vmatprep.subr.mxu0 0.0
    %484 = vmatpush1.msra.mxu0 0.0
    %485 = vmatprep.subr.mxu0 0.0
    %486 = vmatpush1.msra.mxu0 0.0
    %487 = vmatprep.subr.mxu0 0.0
    %488 = vmatpush1.msra.mxu0 0.0
    %489 = vmatprep.subr.mxu0 0.0
    %490 = vmatpush1.msra.mxu0 0.0
    %491 = vmatprep.mubr.f32.mxu0 0.0
    %492 = vmatmul.mubr.f32.gmra.mrb[0].mxu0 %v425
    %v493 = vpop.f32.mrb[0].mxu0
    %v494 = vadd.f32 %v421, %v493
    %v495 = vpop.f32.mrb[0].mxu0
    %496 = vdwg.mxu0
    %v497 = vld [vmem:[%s8] sm:$0x1]
    %v499 = vlaneseq
    %v500 = vshrl.u32 %v499, 7
    %v501 = vsub.s32 0, %v500
    %v502 = vrot.slane %v497, %v501
    %v504 = vadd.f32 %v494, %v502
    %v505 = vmax.f32 %v504, 0.0
    %v506 = vld [vmem:[%s9] sm:$0xff]
    %v507 = vld [vmem:[%s9 + $0x8] sm:$0xff]
    %v508 = vld [vmem:[%s9 + $0x10] sm:$0xff]
    %v509 = vld [vmem:[%s9 + $0x18] sm:$0xff]
    %v510 = vld [vmem:[%s9 + $0x20] sm:$0xff]
    %v511 = vld [vmem:[%s9 + $0x28] sm:$0xff]
    %v512 = vld [vmem:[%s10] sm:$0x1]
    %v514 = vlaneseq
    %v515 = vshrl.u32 %v514, 7
    %v516 = vsub.s32 0, %v515
    %v517 = vrot.slane %v512, %v516
    %vm519 = vcmask 392192
    %v521 = vsel %vm519, %v505, 0
    %523 = vmatprep.subr.mxu0 0.0
    %524 = vmatpush1.msra.mxu0 %v506
    %525 = vmatprep.subr.mxu0 0.0
    %526 = vmatpush1.msra.mxu0 %v507
    %527 = vmatprep.subr.mxu0 0.0
    %528 = vmatpush1.msra.mxu0 %v508
    %529 = vmatprep.subr.mxu0 0.0
    %530 = vmatpush1.msra.mxu0 %v509
    %531 = vmatprep.subr.mxu0 0.0
    %532 = vmatpush1.msra.mxu0 %v510
    %533 = vmatprep.subr.mxu0 0.0
    %534 = vmatpush1.msra.mxu0 %v511
    %535 = vmatprep.subr.mxu0 0.0
    %536 = vmatpush1.msra.mxu0 0.0
    %537 = vmatprep.subr.mxu0 0.0
    %538 = vmatpush1.msra.mxu0 0.0
    %539 = vmatprep.subr.mxu0 0.0
    %540 = vmatpush1.msra.mxu0 0.0
    %541 = vmatprep.subr.mxu0 0.0
    %542 = vmatpush1.msra.mxu0 0.0
    %543 = vmatprep.subr.mxu0 0.0
    %544 = vmatpush1.msra.mxu0 0.0
    %545 = vmatprep.subr.mxu0 0.0
    %546 = vmatpush1.msra.mxu0 0.0
    %547 = vmatprep.subr.mxu0 0.0
    %548 = vmatpush1.msra.mxu0 0.0
    %549 = vmatprep.subr.mxu0 0.0
    %550 = vmatpush1.msra.mxu0 0.0
    %551 = vmatprep.subr.mxu0 0.0
    %552 = vmatpush1.msra.mxu0 0.0
    %553 = vmatprep.subr.mxu0 0.0
    %554 = vmatpush1.msra.mxu0 0.0
    %555 = vmatprep.subr.mxu0 0.0
    %556 = vmatpush1.msra.mxu0 0.0
    %557 = vmatprep.subr.mxu0 0.0
    %558 = vmatpush1.msra.mxu0 0.0
    %559 = vmatprep.subr.mxu0 0.0
    %560 = vmatpush1.msra.mxu0 0.0
    %561 = vmatprep.subr.mxu0 0.0
    %562 = vmatpush1.msra.mxu0 0.0
    %563 = vmatprep.subr.mxu0 0.0
    %564 = vmatpush1.msra.mxu0 0.0
    %565 = vmatprep.subr.mxu0 0.0
    %566 = vmatpush1.msra.mxu0 0.0
    %567 = vmatprep.subr.mxu0 0.0
    %568 = vmatpush1.msra.mxu0 0.0
    %569 = vmatprep.subr.mxu0 0.0
    %570 = vmatpush1.msra.mxu0 0.0
    %571 = vmatprep.subr.mxu0 0.0
    %572 = vmatpush1.msra.mxu0 0.0
    %573 = vmatprep.subr.mxu0 0.0
    %574 = vmatpush1.msra.mxu0 0.0
    %575 = vmatprep.subr.mxu0 0.0
    %576 = vmatpush1.msra.mxu0 0.0
    %577 = vmatprep.subr.mxu0 0.0
    %578 = vmatpush1.msra.mxu0 0.0
    %579 = vmatprep.subr.mxu0 0.0
    %580 = vmatpush1.msra.mxu0 0.0
    %581 = vmatprep.subr.mxu0 0.0
    %582 = vmatpush1.msra.mxu0 0.0
    %583 = vmatprep.subr.mxu0 0.0
    %584 = vmatpush1.msra.mxu0 0.0
    %585 = vmatprep.subr.mxu0 0.0
    %586 = vmatpush1.msra.mxu0 0.0
    %587 = vmatprep.mubr.f32.mxu0 0.0
    %588 = vmatmul.mubr.f32.gmra.mrb[0].mxu0 %v521
    %v589 = vpop.f32.mrb[0].mxu0
    %v590 = vadd.f32 %v517, %v589
    %v591 = vpop.f32.mrb[0].mxu0
    %592 = vdwg.mxu0
    %v593 = vmax.f32 %v590, 0.0
    %v594 = vld [vmem:[%s11] sm:$0xff]
    %v595 = vld [vmem:[%s11 + $0x8] sm:$0xff]
    %v596 = vld [vmem:[%s11 + $0x10] sm:$0xff]
    %v597 = vld [vmem:[%s11 + $0x18] sm:$0xff]
    %v598 = vld [vmem:[%s12] sm:$0x1]
    %v600 = vlaneseq
    %v601 = vshrl.u32 %v600, 7
    %v602 = vsub.s32 0, %v601
    %v603 = vrot.slane %v598, %v602
    %vm605 = vcmask 261120
    %v607 = vsel %vm605, %v593, 0
    %609 = vmatprep.subr.mxu0 0.0
    %610 = vmatpush1.msra.mxu0 %v594
    %611 = vmatprep.subr.mxu0 0.0
    %612 = vmatpush1.msra.mxu0 %v595
    %613 = vmatprep.subr.mxu0 0.0
    %614 = vmatpush1.msra.mxu0 %v596
    %615 = vmatprep.subr.mxu0 0.0
    %616 = vmatpush1.msra.mxu0 %v597
    %617 = vmatprep.subr.mxu0 0.0
    %618 = vmatpush1.msra.mxu0 0.0
    %619 = vmatprep.subr.mxu0 0.0
    %620 = vmatpush1.msra.mxu0 0.0
    %621 = vmatprep.subr.mxu0 0.0
    %622 = vmatpush1.msra.mxu0 0.0
    %623 = vmatprep.subr.mxu0 0.0
    %624 = vmatpush1.msra.mxu0 0.0
    %625 = vmatprep.subr.mxu0 0.0
    %626 = vmatpush1.msra.mxu0 0.0
    %627 = vmatprep.subr.mxu0 0.0
    %628 = vmatpush1.msra.mxu0 0.0
    %629 = vmatprep.subr.mxu0 0.0
    %630 = vmatpush1.msra.mxu0 0.0
    %631 = vmatprep.subr.mxu0 0.0
    %632 = vmatpush1.msra.mxu0 0.0
    %633 = vmatprep.subr.mxu0 0.0
    %634 = vmatpush1.msra.mxu0 0.0
    %635 = vmatprep.subr.mxu0 0.0
    %636 = vmatpush1.msra.mxu0 0.0
    %637 = vmatprep.subr.mxu0 0.0
    %638 = vmatpush1.msra.mxu0 0.0
    %639 = vmatprep.subr.mxu0 0.0
    %640 = vmatpush1.msra.mxu0 0.0
    %641 = vmatprep.subr.mxu0 0.0
    %642 = vmatpush1.msra.mxu0 0.0
    %643 = vmatprep.subr.mxu0 0.0
    %644 = vmatpush1.msra.mxu0 0.0
    %645 = vmatprep.subr.mxu0 0.0
    %646 = vmatpush1.msra.mxu0 0.0
    %647 = vmatprep.subr.mxu0 0.0
    %648 = vmatpush1.msra.mxu0 0.0
    %649 = vmatprep.subr.mxu0 0.0
    %650 = vmatpush1.msra.mxu0 0.0
    %651 = vmatprep.subr.mxu0 0.0
    %652 = vmatpush1.msra.mxu0 0.0
    %653 = vmatprep.subr.mxu0 0.0
    %654 = vmatpush1.msra.mxu0 0.0
    %655 = vmatprep.subr.mxu0 0.0
    %656 = vmatpush1.msra.mxu0 0.0
    %657 = vmatprep.subr.mxu0 0.0
    %658 = vmatpush1.msra.mxu0 0.0
    %659 = vmatprep.subr.mxu0 0.0
    %660 = vmatpush1.msra.mxu0 0.0
    %661 = vmatprep.subr.mxu0 0.0
    %662 = vmatpush1.msra.mxu0 0.0
    %663 = vmatprep.subr.mxu0 0.0
    %664 = vmatpush1.msra.mxu0 0.0
    %665 = vmatprep.subr.mxu0 0.0
    %666 = vmatpush1.msra.mxu0 0.0
    %667 = vmatprep.subr.mxu0 0.0
    %668 = vmatpush1.msra.mxu0 0.0
    %669 = vmatprep.subr.mxu0 0.0
    %670 = vmatpush1.msra.mxu0 0.0
    %671 = vmatprep.subr.mxu0 0.0
    %672 = vmatpush1.msra.mxu0 0.0
    %673 = vmatprep.mubr.f32.mxu0 0.0
    %674 = vmatmul.mubr.f32.gmra.mrb[0].mxu0 %v607
    %v675 = vpop.f32.mrb[0].mxu0
    %v676 = vadd.f32 %v603, %v675
    %v677 = vpop.f32.mrb[0].mxu0
    %678 = vdwg.mxu0
    %v679 = vmax.f32 %v676, 0.0
    %680 = vst [vmem:[#allocation11] sm:$0xff] %v679
    // Predicated region
    $region74: #{tpu_custom_call.1} parent=1 // pred_check
      _
    $region75: #{tpu_custom_call.1} parent=1 // pred_check_branch
      %682 = sbr.rel (0) target = $region77
    $region76: #{tpu_custom_call.1} parent=1 // pred_region
      %s684 = ssub.s32 128, 128
      %685 = vsyncadd [#allocation4], %s684
      %s687 = sshll.u32 [#allocation11], 4
      %s688 = int_to_ptr.vmem [resolvable:$true] %s687
      %690 = dma.vmem_to_hbm [thread:$0]  %s688, 128, %s13, [#allocation4]
    $region77: #{tpu_custom_call.1} parent=1 // pred_fallthru
      _
    // Predicated region
    $region78: #{tpu_custom_call.1} parent=1 // pred_check
      _
    $region79: #{tpu_custom_call.1} parent=1 // pred_check_branch
      %692 = sbr.rel (0) target = $region81
    $region80: #{tpu_custom_call.1} parent=1 // pred_region
      %693 = dma.done [#allocation4], 128
    $region81: #{tpu_custom_call.1} parent=1 // pred_fallthru
      _
    %694 = vsyncpa [#allocation3], 1
    %695 = vsyncpa [#allocation6], 1
    %696 = vsyncpa [#allocation9], 1
    %697 = vsyncpa [#allocation4], 1

</llo_original>
